<compile_context>
chip_gen: v7x
topology: tpu7x:2x2x1
jax: 0.10.0
libtpu: 0.0.40
codegen_flags: <defaults>
</compile_context>

<pallas_src>
import jax
import jax.numpy as jnp
from jax.experimental import pallas as pl
from jax.experimental.pallas import tpu as pltpu


def _sdpa_kernel(q_ref, k_ref, v_ref, mask_ref, ctx_ref, prob_ref):
    # q_ref/ctx_ref: (G, TQ, D); k_ref/v_ref: (G, S, D)
    # mask_ref: (1 or G, TQ, S) int8; prob_ref: (G, TQ, S) bf16
    q = q_ref[...]                    # bf16, softmax scale already folded in
    k = k_ref[...]                    # bf16
    v = v_ref[...]                    # bf16
    masked = mask_ref[...] != 0       # int8 -> predicate (broadcasts over G)

    # scores[g, q, s] = sum_d q[g, q, d] * k[g, s, d]
    # bf16 MXU operands, f32 accumulation; contraction on D -> no K transpose.
    scores = jnp.einsum("gqd,gsd->gqs", q, k,
                        preferred_element_type=jnp.float32)
    scores = jnp.where(masked, jnp.float32(-1000000000.0), scores)

    # Numerically-stable softmax over the key axis, kept in f32
    # (v5e VPU/EUP have no bf16 path; f32 also preserves tolerance headroom).
    m = jnp.max(scores, axis=-1, keepdims=True)
    p = jnp.exp(scores - m)
    denom = jnp.sum(p, axis=-1, keepdims=True)
    prob = p * pl.reciprocal(denom, approx=True)   # EUP vrcp

    # context = prob @ V  (bf16 MXU operands, f32 accumulation)
    ctx = jnp.einsum("gqs,gsd->gqd", prob.astype(v.dtype), v,
                     preferred_element_type=jnp.float32)

    ctx_ref[...] = ctx.astype(ctx_ref.dtype)
    prob_ref[...] = prob.astype(prob_ref.dtype)


def _pick_tq(S):
    """Query-tile size: full S if small, else the largest divisor of S that is
    a multiple of 8 and <= 512 (sublane-aligned)."""
    if S <= 512:
        return S
    for tq in range(512, 7, -8):
        if S % tq == 0:
            return tq
    return S


def _vmem_limit_bytes():
    """Generation-aware VMEM limit (v5e/v6e: 128 MiB physical, v7x: 64 MiB)."""
    cap = 64 * 1024 * 1024
    try:
        info = pltpu.get_tpu_info()
        cap = int(getattr(info, "vmem_capacity_bytes", cap))
    except Exception:
        pass
    return min(int(cap * 0.75), 100 * 1024 * 1024)


def _tile_footprint_bytes(g, gm, S, D, TQ):
    """Estimated per-step VMEM footprint (double-buffered IO + f32 temps)."""
    io = (g * TQ * D * 2        # Q tile (bf16)
          + 2 * g * S * D * 2   # K, V slabs (bf16)
          + gm * TQ * S * 1     # mask tile (int8)
          + g * TQ * D * 4      # ctx tile (f32)
          + g * TQ * S * 2)     # prob tile (bf16)
    temps = 2 * g * TQ * S * 4  # scores + exp(scores) in f32
    return 2 * io + temps


def _pick_g(BH, S, D, TQ, mask_bcast, budget_bytes):
    """Heads per grid step: largest divisor of BH fitting the VMEM budget.
    Capped at BH//2 so the head (parallel) axis keeps >=2 steps for the v7x
    megacore; the q-tile axis stays sequential to preserve K/V reuse."""
    g_cap = BH if BH <= 1 else BH // 2
    best = None
    for g in range(1, g_cap + 1):
        if BH % g:
            continue
        gm = 1 if mask_bcast else g
        if _tile_footprint_bytes(g, gm, S, D, TQ) <= budget_bytes:
            best = g
    if best is None:
        raise ValueError(
            f"attention tile (S={S}, D={D}, TQ={TQ}) does not fit the VMEM "
            f"budget of {budget_bytes} bytes even with one head per step")
    return best


def scaled_dot_product_attention(Q, K, V, attn_mask, *, d_head):
    """Q, K, V: [B, H, S, D] float32; attn_mask: bool, broadcastable to
    [B, H, S, S] (True = masked).

    Returns (context [B, H, S, D] float32, attention_prob [B, H, S, S] bf16).
    """
    B, H, S, D = Q.shape
    BH = B * H
    scale = 1.0 / float(d_head) ** 0.5

    # bf16 MXU operands; softmax scale folded into the Q cast (fused by XLA).
    q = (Q.reshape(BH, S, D) * scale).astype(jnp.bfloat16)
    k = K.reshape(BH, S, D).astype(jnp.bfloat16)
    v = V.reshape(BH, S, D).astype(jnp.bfloat16)

    # Broadcast-aware mask handling: never materialize a [B,H,S,S] copy of a
    # broadcast mask; ship int8 (4x less traffic than int32).
    mask = jnp.asarray(attn_mask)
    if mask.ndim == 2:
        mask_i8 = mask.reshape(1, S, S).astype(jnp.int8)
        mask_bcast = True
    elif mask.ndim == 4 and mask.shape[0] == 1 and mask.shape[1] == 1:
        mask_i8 = mask.reshape(1, S, S).astype(jnp.int8)
        mask_bcast = True
    else:
        mask_i8 = jnp.broadcast_to(mask, (B, H, S, S)).reshape(BH, S, S)
        mask_i8 = mask_i8.astype(jnp.int8)
        mask_bcast = False

    TQ = _pick_tq(S)
    vmem_limit = _vmem_limit_bytes()
    G = _pick_g(BH, S, D, TQ, mask_bcast, int(vmem_limit * 0.7))
    grid = (BH // G, S // TQ)

    q_spec = pl.BlockSpec((G, TQ, D), lambda h, qi: (h, qi, 0))
    kv_spec = pl.BlockSpec((G, S, D), lambda h, qi: (h, 0, 0))
    prob_spec = pl.BlockSpec((G, TQ, S), lambda h, qi: (h, qi, 0))
    if mask_bcast:
        mask_spec = pl.BlockSpec((1, TQ, S), lambda h, qi: (0, qi, 0))
    else:
        mask_spec = pl.BlockSpec((G, TQ, S), lambda h, qi: (h, qi, 0))

    cost = pl.CostEstimate(
        flops=4 * BH * S * S * D,          # two matmuls, 2*M*N*K each
        transcendentals=BH * S * S,        # exp
        bytes_accessed=(3 * BH * S * D * 2     # Q, K, V (bf16)
                        + int(mask_i8.size)    # mask (int8)
                        + BH * S * D * 4       # ctx (f32)
                        + BH * S * S * 2),     # prob (bf16)
    )

    ctx, prob = pl.pallas_call(
        _sdpa_kernel,
        out_shape=(
            jax.ShapeDtypeStruct((BH, S, D), Q.dtype),
            jax.ShapeDtypeStruct((BH, S, S), jnp.bfloat16),
        ),
        grid_spec=pltpu.PrefetchScalarGridSpec(
            num_scalar_prefetch=0,
            grid=grid,
            in_specs=[q_spec, kv_spec, kv_spec, mask_spec],
            out_specs=[q_spec, prob_spec],
        ),
        compiler_params=pltpu.CompilerParams(
            # q-tile axis sequential -> K/V slabs fetched once per head group
            # (not duplicated across v7x's two TensorCores).
            dimension_semantics=("parallel", "arbitrary"),
            vmem_limit_bytes=vmem_limit,
        ),
        cost_estimate=cost,
    )(q, k, v, mask_i8)

    return ctx.reshape(B, H, S, D), prob.reshape(B, H, S, S)


def _reference(Q, K, V, attn_mask, d_head):
    scale = 1.0 / float(d_head) ** 0.5
    scores = jnp.einsum("bhsd,bhtd->bhst", Q, K) * scale
    scores = jnp.where(attn_mask, -1000000000.0, scores)
    prob = jax.nn.softmax(scores, axis=-1)
    ctx = jnp.einsum("bhst,bhtd->bhsd", prob, V)
    return ctx, prob


def _run_case(key, B, H, S, D, broadcast_mask):
    kq, kk, kv = jax.random.split(key, 3)
    Q = jax.random.normal(kq, (B, H, S, D), dtype=jnp.float32)
    K = jax.random.normal(kk, (B, H, S, D), dtype=jnp.float32)
    V = jax.random.normal(kv, (B, H, S, D), dtype=jnp.float32)

    # causal attention mask (True = masked)
    causal = jnp.triu(jnp.ones((S, S), dtype=jnp.bool_), k=1)
    if broadcast_mask:
        attn_mask = causal.reshape(1, 1, S, S)   # broadcast path (no [B,H,S,S] copy)
    else:
        attn_mask = jnp.broadcast_to(causal, (B, H, S, S))  # general per-head path

    ctx, prob = scaled_dot_product_attention(Q, K, V, attn_mask, d_head=D)
    jax.block_until_ready((ctx, prob))

    ref_ctx, ref_prob = _reference(Q, K, V, attn_mask, D)
    # bf16 MXU operands + bf16 prob output + approx reciprocal -> looser tolerance.
    assert jnp.allclose(ctx, ref_ctx, atol=2e-2, rtol=2e-2)
    assert jnp.allclose(prob.astype(jnp.float32), ref_prob, atol=2e-2, rtol=2e-2)


if __name__ == "__main__":
    key = jax.random.PRNGKey(0)
    k1, k2 = jax.random.split(key)

    # Small config implied by the module (d_head = 32); per-head mask path.
    _run_case(k1, B=2, H=2, S=8, D=32, broadcast_mask=False)

    # Larger config exercising the query-tiled grid + broadcast-mask path.
    _run_case(k2, B=1, H=2, S=1024, D=64, broadcast_mask=True)

    print("KERNEL_OK")
</pallas_src>

<mosaic_0001>
module attributes {stable_mosaic.version = 11 : i64} {
  func.func @_sdpa_kernel(%arg0: i32, %arg1: i32, %arg2: memref<2x8x32xbf16, #tpu.memory_space<vmem>>, %arg3: memref<2x8x32xbf16, #tpu.memory_space<vmem>>, %arg4: memref<2x8x32xbf16, #tpu.memory_space<vmem>>, %arg5: memref<2x8x8xi8, #tpu.memory_space<vmem>>, %arg6: memref<2x8x32xf32, #tpu.memory_space<vmem>>, %arg7: memref<2x8x8xbf16, #tpu.memory_space<vmem>>) attributes {dimension_semantics = [#tpu.dimension_semantics<parallel>, #tpu.dimension_semantics<arbitrary>], iteration_bounds = array<i64: 2, 1>, scalar_prefetch = 0 : i64, scratch_operands = 0 : i64, tpu.core_type = #tpu.core_type<tc>, window_params = [{transform_indices = @transform_0, window_bounds = array<i64: 2, 8, 32>}, {transform_indices = @transform_1, window_bounds = array<i64: 2, 8, 32>}, {transform_indices = @transform_2, window_bounds = array<i64: 2, 8, 32>}, {transform_indices = @transform_3, window_bounds = array<i64: 2, 8, 8>}, {transform_indices = @transform_4, window_bounds = array<i64: 2, 8, 32>}, {transform_indices = @transform_5, window_bounds = array<i64: 2, 8, 8>}]} {
    %c0 = arith.constant 0 : index
    %c0_0 = arith.constant 0 : index
    %c0_1 = arith.constant 0 : index
    %0 = vector.load %arg2[%c0, %c0_0, %c0_1] : memref<2x8x32xbf16, #tpu.memory_space<vmem>>, vector<2x8x32xbf16>
    %c0_2 = arith.constant 0 : index
    %c0_3 = arith.constant 0 : index
    %c0_4 = arith.constant 0 : index
    %1 = vector.load %arg3[%c0_2, %c0_3, %c0_4] : memref<2x8x32xbf16, #tpu.memory_space<vmem>>, vector<2x8x32xbf16>
    %c0_5 = arith.constant 0 : index
    %c0_6 = arith.constant 0 : index
    %c0_7 = arith.constant 0 : index
    %2 = vector.load %arg4[%c0_5, %c0_6, %c0_7] : memref<2x8x32xbf16, #tpu.memory_space<vmem>>, vector<2x8x32xbf16>
    %c0_8 = arith.constant 0 : index
    %c0_9 = arith.constant 0 : index
    %c0_10 = arith.constant 0 : index
    %3 = vector.load %arg5[%c0_8, %c0_9, %c0_10] : memref<2x8x8xi8, #tpu.memory_space<vmem>>, vector<2x8x8xi8>
    %c0_i8 = arith.constant 0 : i8
    %4 = vector.broadcast %c0_i8 : i8 to vector<2x8x8xi8>
    %5 = arith.cmpi ne, %3, %4 : vector<2x8x8xi8>
    "tpu.trace_start"() <{level = 10 : i32, message = "gqd,gsd->gqs"}> : () -> ()
    %cst = arith.constant dense<0.000000e+00> : vector<2x8x8xf32>
    %6 = tpu.matmul %0, %1, %cst {dimension_numbers = #tpu.dot_dimension_numbers<[2], [2], [1], [1], [0, 0, 0, 1, 1, 1], [0], [0]>} : vector<2x8x32xbf16>, vector<2x8x32xbf16>, vector<2x8x8xf32> -> vector<2x8x8xf32>
    %cst_11 = arith.constant -1.000000e+09 : f32
    "tpu.trace_stop"() : () -> ()
    %7 = vector.broadcast %cst_11 : f32 to vector<2x8x8xf32>
    %8 = arith.select %5, %7, %6 : vector<2x8x8xi1>, vector<2x8x8xf32>
    %cst_12 = arith.constant dense<0xFF800000> : vector<2x8xf32>
    %9 = vector.multi_reduction <maximumf>, %8, %cst_12 [2] : vector<2x8x8xf32> to vector<2x8xf32>
    %10 = vector.shape_cast %9 : vector<2x8xf32> to vector<2x8x1xf32>
    %11 = vector.broadcast %10 : vector<2x8x1xf32> to vector<2x8x8xf32>
    %12 = arith.subf %8, %11 : vector<2x8x8xf32>
    %13 = math.exp %12 : vector<2x8x8xf32>
    %cst_13 = arith.constant dense<0.000000e+00> : vector<2x8xf32>
    %14 = vector.multi_reduction <add>, %13, %cst_13 [2] : vector<2x8x8xf32> to vector<2x8xf32>
    %15 = vector.shape_cast %14 : vector<2x8xf32> to vector<2x8x1xf32>
    %16 = tpu.reciprocal %15 {approx = true} : vector<2x8x1xf32> -> vector<2x8x1xf32>
    %17 = vector.broadcast %16 : vector<2x8x1xf32> to vector<2x8x8xf32>
    %18 = arith.mulf %13, %17 : vector<2x8x8xf32>
    %19 = arith.truncf %18 : vector<2x8x8xf32> to vector<2x8x8xbf16>
    "tpu.trace_start"() <{level = 10 : i32, message = "gqs,gsd->gqd"}> : () -> ()
    %cst_14 = arith.constant dense<0.000000e+00> : vector<2x8x32xf32>
    %20 = tpu.matmul %19, %2, %cst_14 {dimension_numbers = #tpu.dot_dimension_numbers<[2], [1], [1], [2], [0, 0, 0, 1, 1, 2], [0], [0]>} : vector<2x8x8xbf16>, vector<2x8x32xbf16>, vector<2x8x32xf32> -> vector<2x8x32xf32>
    "tpu.trace_stop"() : () -> ()
    %c0_15 = arith.constant 0 : index
    %c0_16 = arith.constant 0 : index
    %c0_17 = arith.constant 0 : index
    %21 = vector.load %arg6[%c0_15, %c0_16, %c0_17] : memref<2x8x32xf32, #tpu.memory_space<vmem>>, vector<2x8x32xf32>
    tpu.vector_store %arg6[%c0_15, %c0_16, %c0_17], %20 {strides = array<i32>} : memref<2x8x32xf32, #tpu.memory_space<vmem>>, vector<2x8x32xf32>,
    %22 = arith.truncf %18 : vector<2x8x8xf32> to vector<2x8x8xbf16>
    %c0_18 = arith.constant 0 : index
    %c0_19 = arith.constant 0 : index
    %c0_20 = arith.constant 0 : index
    %23 = vector.load %arg7[%c0_18, %c0_19, %c0_20] : memref<2x8x8xbf16, #tpu.memory_space<vmem>>, vector<2x8x8xbf16>
    tpu.vector_store %arg7[%c0_18, %c0_19, %c0_20], %22 {strides = array<i32>} : memref<2x8x8xbf16, #tpu.memory_space<vmem>>, vector<2x8x8xbf16>,
    return
  }
  func.func @transform_0(%arg0: i32, %arg1: i32) -> (i32, i32, i32) {
    %c0_i32 = arith.constant 0 : i32
    %c0_i32_0 = arith.constant 0 : i32
    return %arg0, %arg1, %c0_i32 : i32, i32, i32
  }
  func.func @transform_1(%arg0: i32, %arg1: i32) -> (i32, i32, i32) {
    %c0_i32 = arith.constant 0 : i32
    %c0_i32_0 = arith.constant 0 : i32
    %c0_i32_1 = arith.constant 0 : i32
    return %arg0, %c0_i32, %c0_i32_0 : i32, i32, i32
  }
  func.func @transform_2(%arg0: i32, %arg1: i32) -> (i32, i32, i32) {
    %c0_i32 = arith.constant 0 : i32
    %c0_i32_0 = arith.constant 0 : i32
    %c0_i32_1 = arith.constant 0 : i32
    return %arg0, %c0_i32, %c0_i32_0 : i32, i32, i32
  }
  func.func @transform_3(%arg0: i32, %arg1: i32) -> (i32, i32, i32) {
    %c0_i32 = arith.constant 0 : i32
    %c0_i32_0 = arith.constant 0 : i32
    return %arg0, %arg1, %c0_i32 : i32, i32, i32
  }
  func.func @transform_4(%arg0: i32, %arg1: i32) -> (i32, i32, i32) {
    %c0_i32 = arith.constant 0 : i32
    %c0_i32_0 = arith.constant 0 : i32
    return %arg0, %arg1, %c0_i32 : i32, i32, i32
  }
  func.func @transform_5(%arg0: i32, %arg1: i32) -> (i32, i32, i32) {
    %c0_i32 = arith.constant 0 : i32
    %c0_i32_0 = arith.constant 0 : i32
    return %arg0, %arg1, %c0_i32 : i32, i32, i32
  }
}

</mosaic_0001>

<llo_original>
// kernel: tpu_custom_call.1
$region0: #{tpu_custom_call.1}
  #allocation0 [shape = 'u32[]', space=smem, size = 0x4, offset = 0x4, fixed_abs, tag = 'smem constant byte address 0x4 - core index']
  #allocation1 [shape = 'u32[144,128]{1,0:T(1,128)}', space=vmem, size = 0x12000, scoped, tag = 'internal scratch']
  %s0 = inlined_call_operand.hbm [shape: bf16[4,8,32], index: 0, kind: input, shape index: {}]
  %s1 = inlined_call_operand.hbm [shape: bf16[4,8,32], index: 1, kind: input, shape index: {}]
  %s2 = inlined_call_operand.hbm [shape: bf16[4,8,32], index: 2, kind: input, shape index: {}]
  %s3 = inlined_call_operand.vmem [shape: s8[4,8,8], index: 3, kind: input, shape index: {}]
  %s4 = inlined_call_operand.hbm [shape: f32[4,8,32], index: 4, kind: output, shape index: {0}]
  %s5 = inlined_call_operand.hbm [shape: bf16[4,8,8], index: 5, kind: output, shape index: {1}]
  %6 = xla_tuple %s4, %s5
  %s7 = sld [smem:[#allocation0]]
  $region69: #{tpu_custom_call.1} parent=0
    _
  %s9 = ssub.s32 1, %s7
  %s10 = scalar_select 0, %s9, %s7
  $region1: #{tpu_custom_call.1} parent=0
    #allocation2 [shape = 'u8[8192]{0}', space=vmem, size = 0x2000, scoped, tag = 'input window, operand 0']
    #allocation3 [shape = 's32[2]{0}', space=sflag, size = 0x8, scoped, tag = 'scoped memory for tpu_custom_call.1']
    #allocation4 [shape = 's32[2]{0}', space=sflag, size = 0x8, scoped, tag = 'scoped memory for tpu_custom_call.1']
    #allocation5 [shape = 'u8[8192]{0}', space=vmem, size = 0x2000, scoped, tag = 'input window, operand 1']
    #allocation6 [shape = 's32[2]{0}', space=sflag, size = 0x8, scoped, tag = 'scoped memory for tpu_custom_call.1']
    #allocation7 [shape = 'u8[8192]{0}', space=vmem, size = 0x2000, scoped, tag = 'input window, operand 2']
    #allocation8 [shape = 'u8[16384]{0}', space=vmem, size = 0x4000, scoped, tag = 'output window, operand 0']
    #allocation9 [shape = 'u8[8192]{0}', space=vmem, size = 0x2000, scoped, tag = 'output window, operand 1']
    #allocation10 [shape = 's32[2]{0}', space=sflag, size = 0x8, scoped, tag = 'scoped memory for tpu_custom_call.1']
    %11 = vsyncpa [#allocation3], 0
    %s12 = scalar_lea.sflag [#allocation3], 1
    %13 = vsyncpa %s12, 0
    %14 = vsyncpa [#allocation6], 0
    %s15 = scalar_lea.sflag [#allocation6], 1
    %16 = vsyncpa %s15, 0
    %17 = vsyncpa [#allocation4], 0
    %s18 = scalar_lea.sflag [#allocation4], 1
    %19 = vsyncpa %s18, 0
    %20 = vsyncpa [#allocation10], 0
    %s21 = scalar_lea.sflag [#allocation10], 1
    %22 = vsyncpa %s21, 0
    loop: start=0, step=1, limit=4
    $region2: #{tpu_custom_call.1} parent=1 // loop_pre_header
      _
    $region3: #{tpu_custom_call.1} parent=1 // loop_header
      %s24 = sphi 0, %s28
      %p25 = scmp.ge.s32.totalorder %s24, 4
      %s31 = sphi 0, %s43
      %s32 = sphi 0, %s39
      %s33 = sphi 0, %s31
      %s34 = sphi 0, %s32
      %s35 = sphi 0, %s33
      %s36 = sphi 0, %s34
      %s48 = sphi 0, %s50
      %s51 = sphi 0, %s48
      %s52 = sphi 0, %s51
      %s68 = sphi 0, %s52
      %s74 = sphi 0, %s76
      %s77 = sphi 0, %s74
      %s78 = sphi 0, %s77
      %s94 = sphi 0, %s78
      %s100 = sphi 0, %s102
      %s103 = sphi 0, %s100
      %s104 = sphi 0, %s103
      %s120 = sphi 0, %s104
      %s128 = sphi 0, %s130
      %s131 = sphi 0, %s128
      %s132 = sphi 0, %s131
      %s148 = sphi 0, %s132
      %s156 = sphi 0, %s158
      %s159 = sphi 0, %s156
      %s160 = sphi 0, %s159
      %s176 = sphi 0, %s160
      %s184 = sphi 0, %s186
      %s187 = sphi 0, %s184
      %s188 = sphi 0, %s187
      %s204 = sphi 0, %s188
    $region4: #{tpu_custom_call.1} parent=1 // loop_header_branch
      %27 = sbr.rel (%p25) target = $region8
    $region5: #{tpu_custom_call.1} parent=1 // loop_body
      %s29 = ssub.s32 %s24, 1
      %s30 = ssub.s32 %s24, 2
      %s37 = sadd.s32 1, %s32
      %p38 = scmp.ge.s32.totalorder %s37, 1
      %s39 = scalar_select %p38, 0, %s37
      %s40 = sadd.s32 1, %s31
      %s41 = scalar_select %p38, %s40, %s31
      %p42 = scmp.ge.s32.totalorder %s41, 2
      %s43 = scalar_select %p42, 0, %s41
      %s44 = ssub.s32 %s31, %s43
      %s45 = ssub.s32 %s32, %s39
      %s46 = sor.u32 %s44, %s45
      %p47 = scmp.eq.s32.totalorder %s46, 0
      %s49 = sadd.s32 %s48, 1
      %s50 = scalar_select %p47, %s48, %s49
      %p53 = pneg %p47
      %p54 = scmp.eq.s32.totalorder %s24, 1
      %p55 = por %p53, %p54
      %p56 = scmp.ne.s32.totalorder %s48, %s51
      %p57 = scmp.eq.s32.totalorder %s24, 0
      %p58 = por %p56, %p57
      %p59 = scmp.ne.s32.totalorder %s48, %s51
      %p60 = scmp.eq.s32.totalorder %s29, 1
      %p61 = por %p59, %p60
      %p62 = scmp.ne.s32.totalorder %s51, %s52
      %p63 = scmp.eq.s32.totalorder %s29, 0
      %p64 = por %p62, %p63
      %p65 = scmp.ne.s32.totalorder %s51, %s52
      %p66 = scmp.eq.s32.totalorder %s30, 1
      %p67 = por %p65, %p66
      %p69 = scmp.ne.s32.totalorder %s52, %s68
      %p70 = scmp.eq.s32.totalorder %s30, 0
      %p71 = por %p69, %p70
      %s72 = ssub.s32 %s31, %s43
      %p73 = scmp.eq.s32.totalorder %s72, 0
      %s75 = sadd.s32 %s74, 1
      %s76 = scalar_select %p73, %s74, %s75
      %p79 = pneg %p73
      %p80 = scmp.eq.s32.totalorder %s24, 1
      %p81 = por %p79, %p80
      %p82 = scmp.ne.s32.totalorder %s74, %s77
      %p83 = scmp.eq.s32.totalorder %s24, 0
      %p84 = por %p82, %p83
      %p85 = scmp.ne.s32.totalorder %s74, %s77
      %p86 = scmp.eq.s32.totalorder %s29, 1
      %p87 = por %p85, %p86
      %p88 = scmp.ne.s32.totalorder %s77, %s78
      %p89 = scmp.eq.s32.totalorder %s29, 0
      %p90 = por %p88, %p89
      %p91 = scmp.ne.s32.totalorder %s77, %s78
      %p92 = scmp.eq.s32.totalorder %s30, 1
      %p93 = por %p91, %p92
      %p95 = scmp.ne.s32.totalorder %s78, %s94
      %p96 = scmp.eq.s32.totalorder %s30, 0
      %p97 = por %p95, %p96
      %s98 = ssub.s32 %s31, %s43
      %p99 = scmp.eq.s32.totalorder %s98, 0
      %s101 = sadd.s32 %s100, 1
      %s102 = scalar_select %p99, %s100, %s101
      %p105 = pneg %p99
      %p106 = scmp.eq.s32.totalorder %s24, 1
      %p107 = por %p105, %p106
      %p108 = scmp.ne.s32.totalorder %s100, %s103
      %p109 = scmp.eq.s32.totalorder %s24, 0
      %p110 = por %p108, %p109
      %p111 = scmp.ne.s32.totalorder %s100, %s103
      %p112 = scmp.eq.s32.totalorder %s29, 1
      %p113 = por %p111, %p112
      %p114 = scmp.ne.s32.totalorder %s103, %s104
      %p115 = scmp.eq.s32.totalorder %s29, 0
      %p116 = por %p114, %p115
      %p117 = scmp.ne.s32.totalorder %s103, %s104
      %p118 = scmp.eq.s32.totalorder %s30, 1
      %p119 = por %p117, %p118
      %p121 = scmp.ne.s32.totalorder %s104, %s120
      %p122 = scmp.eq.s32.totalorder %s30, 0
      %p123 = por %p121, %p122
      %s124 = ssub.s32 %s31, %s43
      %s125 = ssub.s32 %s32, %s39
      %s126 = sor.u32 %s124, %s125
      %p127 = scmp.eq.s32.totalorder %s126, 0
      %s129 = sadd.s32 %s128, 1
      %s130 = scalar_select %p127, %s128, %s129
      %p133 = pneg %p127
      %p134 = scmp.eq.s32.totalorder %s24, 1
      %p135 = por %p133, %p134
      %p136 = scmp.ne.s32.totalorder %s128, %s131
      %p137 = scmp.eq.s32.totalorder %s24, 0
      %p138 = por %p136, %p137
      %p139 = scmp.ne.s32.totalorder %s128, %s131
      %p140 = scmp.eq.s32.totalorder %s29, 1
      %p141 = por %p139, %p140
      %p142 = scmp.ne.s32.totalorder %s131, %s132
      %p143 = scmp.eq.s32.totalorder %s29, 0
      %p144 = por %p142, %p143
      %p145 = scmp.ne.s32.totalorder %s131, %s132
      %p146 = scmp.eq.s32.totalorder %s30, 1
      %p147 = por %p145, %p146
      %p149 = scmp.ne.s32.totalorder %s132, %s148
      %p150 = scmp.eq.s32.totalorder %s30, 0
      %p151 = por %p149, %p150
      %s152 = ssub.s32 %s31, %s43
      %s153 = ssub.s32 %s32, %s39
      %s154 = sor.u32 %s152, %s153
      %p155 = scmp.eq.s32.totalorder %s154, 0
      %s157 = sadd.s32 %s156, 1
      %s158 = scalar_select %p155, %s156, %s157
      %p161 = pneg %p155
      %p162 = scmp.eq.s32.totalorder %s24, 1
      %p163 = por %p161, %p162
      %p164 = scmp.ne.s32.totalorder %s156, %s159
      %p165 = scmp.eq.s32.totalorder %s24, 0
      %p166 = por %p164, %p165
      %p167 = scmp.ne.s32.totalorder %s156, %s159
      %p168 = scmp.eq.s32.totalorder %s29, 1
      %p169 = por %p167, %p168
      %p170 = scmp.ne.s32.totalorder %s159, %s160
      %p171 = scmp.eq.s32.totalorder %s29, 0
      %p172 = por %p170, %p171
      %p173 = scmp.ne.s32.totalorder %s159, %s160
      %p174 = scmp.eq.s32.totalorder %s30, 1
      %p175 = por %p173, %p174
      %p177 = scmp.ne.s32.totalorder %s160, %s176
      %p178 = scmp.eq.s32.totalorder %s30, 0
      %p179 = por %p177, %p178
      %s180 = ssub.s32 %s31, %s43
      %s181 = ssub.s32 %s32, %s39
      %s182 = sor.u32 %s180, %s181
      %p183 = scmp.eq.s32.totalorder %s182, 0
      %s185 = sadd.s32 %s184, 1
      %s186 = scalar_select %p183, %s184, %s185
      %p189 = pneg %p183
      %p190 = scmp.eq.s32.totalorder %s24, 1
      %p191 = por %p189, %p190
      %p192 = scmp.ne.s32.totalorder %s184, %s187
      %p193 = scmp.eq.s32.totalorder %s24, 0
      %p194 = por %p192, %p193
      %p195 = scmp.ne.s32.totalorder %s184, %s187
      %p196 = scmp.eq.s32.totalorder %s29, 1
      %p197 = por %p195, %p196
      %p198 = scmp.ne.s32.totalorder %s187, %s188
      %p199 = scmp.eq.s32.totalorder %s29, 0
      %p200 = por %p198, %p199
      %p201 = scmp.ne.s32.totalorder %s187, %s188
      %p202 = scmp.eq.s32.totalorder %s30, 1
      %p203 = por %p201, %p202
      %p205 = scmp.ne.s32.totalorder %s188, %s204
      %p206 = scmp.eq.s32.totalorder %s30, 0
      %p207 = por %p205, %p206
      %p208 = scmp.le.s32.totalorder 1, %s24
      %p209 = scmp.lt.s32.totalorder %s24, 3
      %p210 = pnand %p208, %p209
      %p211 = pneg %p210
      // Predicated region
      $region9: #{tpu_custom_call.1} parent=5 // pred_check
        _
      $region10: #{tpu_custom_call.1} parent=5 // pred_check_branch
        %213 = sbr.rel (%p210) target = $region12
      $region11: #{tpu_custom_call.1} parent=5 // pred_region
        %s214 = ssub.s32 %s24, 1
      $region12: #{tpu_custom_call.1} parent=5 // pred_fallthru
        _
      %p215 = scmp.lt.s32.totalorder %s24, 2
      // Predicated region
      $region13: #{tpu_custom_call.1} parent=5 // pred_check
        %p216 = pneg %p215
      $region14: #{tpu_custom_call.1} parent=5 // pred_check_branch
        %218 = sbr.rel (%p216) target = $region16
      $region15: #{tpu_custom_call.1} parent=5 // pred_region
        // Predicated region
        $region17: #{tpu_custom_call.1} parent=15 // pred_check
          %p219 = pneg %p58
        $region18: #{tpu_custom_call.1} parent=15 // pred_check_branch
          %221 = sbr.rel (%p219) target = $region20
        $region19: #{tpu_custom_call.1} parent=15 // pred_region
          %s222 = sand.u32 %s48, 1
          %s223 = scalar_lea.sflag [#allocation3], %s222
          %s224 = sand.u32 %s48, 1
          %s225 = smul.addr %s224, 8
          %s226 = scalar_lea.vmem [#allocation2], %s225
          %s227 = smul.u32 2, %s31
          %s229 = ssub.s32 128, 128
          %230 = vsyncadd %s223, %s229
          %s231 = sadd.s32 %s32, %s227
          %s232 = smul.addr %s231, 64
          %s233 = scalar_lea.hbm %s0, %s232
          %s234 = sshll.u32 %s226, 4
          %s235 = int_to_ptr.vmem [resolvable:$true] %s234
          %240 = dma.hbm_to_vmem [thread:$0]  %s233, 128, %s235, %s223, 64, 64, 4
        $region20: #{tpu_custom_call.1} parent=15 // pred_fallthru
          _
        // Predicated region
        $region21: #{tpu_custom_call.1} parent=15 // pred_check
          %p241 = pneg %p84
        $region22: #{tpu_custom_call.1} parent=15 // pred_check_branch
          %243 = sbr.rel (%p241) target = $region24
        $region23: #{tpu_custom_call.1} parent=15 // pred_region
          %s244 = sand.u32 %s24, 1
          %s245 = scalar_lea.sflag [#allocation6], %s244
          %s246 = sand.u32 %s74, 1
          %s247 = smul.addr %s246, 8
          %s248 = scalar_lea.vmem [#allocation5], %s247
          %s249 = smul.u32 2, %s31
          %s251 = ssub.s32 128, 128
          %252 = vsyncadd %s245, %s251
          %s253 = smul.addr %s249, 64
          %s254 = scalar_lea.hbm %s1, %s253
          %s255 = sshll.u32 %s248, 4
          %s256 = int_to_ptr.vmem [resolvable:$true] %s255
          %261 = dma.hbm_to_vmem [thread:$0]  %s254, 128, %s256, %s245, 64, 64, 4
        $region24: #{tpu_custom_call.1} parent=15 // pred_fallthru
          _
        // Predicated region
        $region25: #{tpu_custom_call.1} parent=15 // pred_check
          %p262 = pneg %p110
        $region26: #{tpu_custom_call.1} parent=15 // pred_check_branch
          %264 = sbr.rel (%p262) target = $region28
        $region27: #{tpu_custom_call.1} parent=15 // pred_region
          %s265 = sand.u32 %s24, 1
          %s266 = scalar_lea.sflag [#allocation6], %s265
          %s267 = sand.u32 %s100, 1
          %s268 = smul.addr %s267, 8
          %s269 = scalar_lea.vmem [#allocation7], %s268
          %s270 = smul.u32 2, %s31
          %s272 = ssub.s32 128, 128
          %273 = vsyncadd %s266, %s272
          %s274 = smul.addr %s270, 64
          %s275 = scalar_lea.hbm %s2, %s274
          %s276 = sshll.u32 %s269, 4
          %s277 = int_to_ptr.vmem [resolvable:$true] %s276
          %282 = dma.hbm_to_vmem [thread:$0]  %s275, 128, %s277, %s266, 64, 64, 4
        $region28: #{tpu_custom_call.1} parent=15 // pred_fallthru
          _
        // Predicated region
        $region29: #{tpu_custom_call.1} parent=15 // pred_check
          %p283 = pneg %p138
        $region30: #{tpu_custom_call.1} parent=15 // pred_check_branch
          %285 = sbr.rel (%p283) target = $region32
        $region31: #{tpu_custom_call.1} parent=15 // pred_region
          %s286 = smul.u32 2, %s31
          %p287 = scmp.lt.s32.totalorder %s286, 3
          %s288 = scalar_select %p287, %s286, 3
          %p289 = scmp.lt.s32.totalorder %s32, 0
          %s290 = scalar_select %p289, %s32, 0
          %s291 = sadd.s32 %s290, %s288
          %s292 = smul.addr %s291, 2
          %s293 = scalar_lea.vmem %s3, %s292
          %s294 = smul.u32 2, %s31
        $region32: #{tpu_custom_call.1} parent=15 // pred_fallthru
          _
      $region16: #{tpu_custom_call.1} parent=5 // pred_fallthru
        _
      %p295 = scmp.le.s32.totalorder 1, %s24
      %p296 = scmp.lt.s32.totalorder %s24, 3
      %p297 = pnand %p295, %p296
      %p298 = pneg %p297
      // Predicated region
      $region33: #{tpu_custom_call.1} parent=5 // pred_check
        _
      $region34: #{tpu_custom_call.1} parent=5 // pred_check_branch
        %300 = sbr.rel (%p297) target = $region36
      $region35: #{tpu_custom_call.1} parent=5 // pred_region
        %s301 = ssub.s32 %s24, 1
        %s302 = sand.u32 %s51, 1
        %s303 = scalar_lea.sflag [#allocation3], %s302
        %s304 = sand.u32 %s51, 1
        %s305 = smul.addr %s304, 8
        %s306 = scalar_lea.vmem [#allocation2], %s305
        // Predicated region
        $region37: #{tpu_custom_call.1} parent=35 // pred_check
          %p307 = pneg %p64
        $region38: #{tpu_custom_call.1} parent=35 // pred_check_branch
          %309 = sbr.rel (%p307) target = $region40
        $region39: #{tpu_custom_call.1} parent=35 // pred_region
          %310 = dma.done %s303, 128
        $region40: #{tpu_custom_call.1} parent=35 // pred_fallthru
          _
        %s311 = sand.u32 %s29, 1
        %s312 = scalar_lea.sflag [#allocation6], %s311
        %s313 = sand.u32 %s77, 1
        %s314 = smul.addr %s313, 8
        %s315 = scalar_lea.vmem [#allocation5], %s314
        // Predicated region
        $region41: #{tpu_custom_call.1} parent=35 // pred_check
          %p316 = pneg %p90
        $region42: #{tpu_custom_call.1} parent=35 // pred_check_branch
          %318 = sbr.rel (%p316) target = $region44
        $region43: #{tpu_custom_call.1} parent=35 // pred_region
          %319 = dma.done %s312, 128
        $region44: #{tpu_custom_call.1} parent=35 // pred_fallthru
          _
        %s320 = sand.u32 %s29, 1
        %s321 = scalar_lea.sflag [#allocation6], %s320
        %s322 = sand.u32 %s103, 1
        %s323 = smul.addr %s322, 8
        %s324 = scalar_lea.vmem [#allocation7], %s323
        // Predicated region
        $region45: #{tpu_custom_call.1} parent=35 // pred_check
          %p325 = pneg %p116
        $region46: #{tpu_custom_call.1} parent=35 // pred_check_branch
          %327 = sbr.rel (%p325) target = $region48
        $region47: #{tpu_custom_call.1} parent=35 // pred_region
          %328 = dma.done %s321, 128
        $region48: #{tpu_custom_call.1} parent=35 // pred_fallthru
          _
        %s329 = sand.u32 %s51, 1
        %s330 = scalar_lea.sflag [#allocation3], %s329
        %s331 = sand.u32 %s51, 1
        %s332 = smul.addr %s331, 8
        %s333 = scalar_lea.vmem [#allocation2], %s332
        %p334 = pneg %p64
        %p335 = pneg %p61
        %s336 = sand.u32 %s29, 1
        %s337 = scalar_lea.sflag [#allocation6], %s336
        %s338 = sand.u32 %s77, 1
        %s339 = smul.addr %s338, 8
        %s340 = scalar_lea.vmem [#allocation5], %s339
        %p341 = pneg %p90
        %p342 = pneg %p87
        %s343 = sand.u32 %s29, 1
        %s344 = scalar_lea.sflag [#allocation6], %s343
        %s345 = sand.u32 %s103, 1
        %s346 = smul.addr %s345, 8
        %s347 = scalar_lea.vmem [#allocation7], %s346
        %p348 = pneg %p116
        %p349 = pneg %p113
        %s350 = smul.u32 2, %s33
        %p351 = scmp.lt.s32.totalorder %s350, 3
        %s352 = scalar_select %p351, %s350, 3
        %p353 = scmp.lt.s32.totalorder %s34, 0
        %s354 = scalar_select %p353, %s34, 0
        %s355 = sadd.s32 %s354, %s352
        %s356 = smul.addr %s355, 2
        %s357 = scalar_lea.vmem %s3, %s356
        %p358 = pneg %p144
        %p359 = pneg %p141
        %p360 = pneg %p172
        %p361 = pneg %p169
        %s362 = sand.u32 %s159, 1
        %s363 = scalar_lea.sflag [#allocation4], %s362
        %s364 = sand.u32 %s159, 1
        %s365 = smul.addr %s364, 16
        %s366 = scalar_lea.vmem [#allocation8], %s365
        %p367 = pneg %p200
        %p368 = pneg %p197
        %s369 = sand.u32 %s187, 1
        %s370 = scalar_lea.sflag [#allocation10], %s369
        %s371 = sand.u32 %s187, 1
        %s372 = smul.addr %s371, 8
        %s373 = scalar_lea.vmem [#allocation9], %s372
        %s374 = smul.u32 2, %s33
        %s375 = smul.u32 2, %s33
        %s376 = smul.u32 2, %s33
        %s377 = smul.u32 2, %s33
        %p378 = scmp.lt.s32.totalorder %s377, 3
        %s379 = scalar_select %p378, %s377, 3
        %p380 = scmp.lt.s32.totalorder %s34, 0
        %s381 = scalar_select %p380, %s34, 0
        %s382 = sadd.s32 %s381, %s379
        %s383 = smul.addr %s382, 2
        %s384 = scalar_lea.vmem %s3, %s383
        %s385 = smul.u32 2, %s33
        %s386 = smul.u32 2, %s33
        %s387 = smul.u32 2, %s33
        %v391 = vld [vmem:[%s306] sm:$0xf]
        %v392 = vld [vmem:[%s306 + $0x4] sm:$0xf]
        %v393 = vld [vmem:[%s315] sm:$0xf]
        %v394 = vld [vmem:[%s315 + $0x4] sm:$0xf]
        %v395 = vld [vmem:[%s324] sm:$0xf]
        %v396 = vld [vmem:[%s324 + $0x4] sm:$0xf]
        %v397 = vld [vmem:[%s384] sm:$0x3]
        %v398 = vld [vmem:[%s384 + $0x2] sm:$0x3]
        %vm399 = vnez %v397
        %vm400 = vnez %v398
        %vm401 = vcmask 261120
        %v403 = vsel %vm401, %v391, 0
        %v406 = vsel %vm401, %v393, 0
        %408 = vmatprep.subr.bf16.mxu0 0
        %409 = vmatpush1.bf16.xpose.msra.mxu0 %v406
        %410 = vmatprep.subr.bf16.mxu0 0
        %411 = vmatpush1.bf16.xpose.msra.mxu0 0
        %412 = vmatprep.subr.bf16.mxu0 0
        %413 = vmatpush1.bf16.xpose.msra.mxu0 0
        %414 = vmatprep.subr.bf16.mxu0 0
        %415 = vmatpush1.bf16.xpose.msra.mxu0 0
        %416 = vmatprep.subr.bf16.mxu0 0
        %417 = vmatpush1.bf16.xpose.msra.mxu0 0
        %418 = vmatprep.subr.bf16.mxu0 0
        %419 = vmatpush1.bf16.xpose.msra.mxu0 0
        %420 = vmatprep.subr.bf16.mxu0 0
        %421 = vmatpush1.bf16.xpose.msra.mxu0 0
        %422 = vmatprep.subr.bf16.mxu0 0
        %423 = vmatpush1.bf16.xpose.msra.mxu0 0
        %424 = vmatprep.subr.bf16.mxu0 0
        %425 = vmatpush1.bf16.xpose.msra.mxu0 0
        %426 = vmatprep.subr.bf16.mxu0 0
        %427 = vmatpush1.bf16.xpose.msra.mxu0 0
        %428 = vmatprep.subr.bf16.mxu0 0
        %429 = vmatpush1.bf16.xpose.msra.mxu0 0
        %430 = vmatprep.subr.bf16.mxu0 0
        %431 = vmatpush1.bf16.xpose.msra.mxu0 0
        %432 = vmatprep.subr.bf16.mxu0 0
        %433 = vmatpush1.bf16.xpose.msra.mxu0 0
        %434 = vmatprep.subr.bf16.mxu0 0
        %435 = vmatpush1.bf16.xpose.msra.mxu0 0
        %436 = vmatprep.subr.bf16.mxu0 0
        %437 = vmatpush1.bf16.xpose.msra.mxu0 0
        %438 = vmatprep.subr.bf16.mxu0 0
        %439 = vmatpush1.bf16.xpose.msra.mxu0 0
        %440 = vmatprep.mubr.bf16.mxu0 0
        %441 = vmatmul.mubr.bf16.gmra.mrb[0].mxu0 %v403
        %v442 = vpop.f32.mrb[0].mxu0
        %v443 = vadd.f32 0.0, %v442
        %v444 = vpop.f32.mrb[0].mxu0
        %v445 = vpop.f32.mrb[0].mxu0
        %v446 = vpop.f32.mrb[0].mxu0
        %447 = vdwg.mxu0
        %v449 = vsel %vm401, %v392, 0
        %v452 = vsel %vm401, %v394, 0
        %454 = vmatprep.subr.bf16.mxu0 0
        %455 = vmatpush1.bf16.xpose.msra.mxu0 %v452
        %456 = vmatprep.subr.bf16.mxu0 0
        %457 = vmatpush1.bf16.xpose.msra.mxu0 0
        %458 = vmatprep.subr.bf16.mxu0 0
        %459 = vmatpush1.bf16.xpose.msra.mxu0 0
        %460 = vmatprep.subr.bf16.mxu0 0
        %461 = vmatpush1.bf16.xpose.msra.mxu0 0
        %462 = vmatprep.subr.bf16.mxu0 0
        %463 = vmatpush1.bf16.xpose.msra.mxu0 0
        %464 = vmatprep.subr.bf16.mxu0 0
        %465 = vmatpush1.bf16.xpose.msra.mxu0 0
        %466 = vmatprep.subr.bf16.mxu0 0
        %467 = vmatpush1.bf16.xpose.msra.mxu0 0
        %468 = vmatprep.subr.bf16.mxu0 0
        %469 = vmatpush1.bf16.xpose.msra.mxu0 0
        %470 = vmatprep.subr.bf16.mxu0 0
        %471 = vmatpush1.bf16.xpose.msra.mxu0 0
        %472 = vmatprep.subr.bf16.mxu0 0
        %473 = vmatpush1.bf16.xpose.msra.mxu0 0
        %474 = vmatprep.subr.bf16.mxu0 0
        %475 = vmatpush1.bf16.xpose.msra.mxu0 0
        %476 = vmatprep.subr.bf16.mxu0 0
        %477 = vmatpush1.bf16.xpose.msra.mxu0 0
        %478 = vmatprep.subr.bf16.mxu0 0
        %479 = vmatpush1.bf16.xpose.msra.mxu0 0
        %480 = vmatprep.subr.bf16.mxu0 0
        %481 = vmatpush1.bf16.xpose.msra.mxu0 0
        %482 = vmatprep.subr.bf16.mxu0 0
        %483 = vmatpush1.bf16.xpose.msra.mxu0 0
        %484 = vmatprep.subr.bf16.mxu0 0
        %485 = vmatpush1.bf16.xpose.msra.mxu0 0
        %486 = vmatprep.mubr.bf16.mxu0 0
        %487 = vmatmul.mubr.bf16.gmra.mrb[0].mxu0 %v449
        %v488 = vpop.f32.mrb[0].mxu0
        %v489 = vadd.f32 0.0, %v488
        %v490 = vpop.f32.mrb[0].mxu0
        %v491 = vpop.f32.mrb[0].mxu0
        %v492 = vpop.f32.mrb[0].mxu0
        %493 = vdwg.mxu0
        %v494 = vsel %vm399, 16843009, 0
        %v495 = vsel %vm400, 16843009, 0
        %v496 = vunpack.c.0.s8 %v494
        %v497 = vunpack.c.0.s8 %v495
        %vm498 = vcmp.ne.s32.totalorder %v496, 0
        %vm499 = vcmp.ne.s32.totalorder %v497, 0
        %v500 = vsel %vm498, -1e+09, %v443
        %v501 = vsel %vm499, -1e+09, %v489
        %vm502 = vcmask 64512
        %v503 = vsel %vm502, %v500, -inf
        %504 = vmax.xlane.f32.xlu0 %v503
        %v505 = vpop.xlane.xlu0 %504
        %v506 = vsel %vm502, %v501, -inf
        %507 = vmax.xlane.f32.xlu0 %v506
        %v508 = vpop.xlane.xlu0 %507
        %v509 = vsub.f32 %v500, %v505
        %v510 = vsub.f32 %v501, %v508
        %v511 = vmul.f32 %v509, 1.442695
        %v512 = vpow.pop %v511
        %v513 = vmul.f32 %v510, 1.442695
        %v514 = vpow.pop %v513
        %v515 = vsel %vm502, %v512, 0.0
        %516 = vadd.xlane.f32.xlu0 %v515
        %v517 = vpop.xlane.xlu0 %516
        %v518 = vsel %vm502, %v514, 0.0
        %519 = vadd.xlane.f32.xlu0 %v518
        %v520 = vpop.xlane.xlu0 %519
        %v521 = vrcp.pop %v517
        %v522 = vrcp.pop %v520
        %v523 = vmul.f32 %v512, %v521
        %v524 = vmul.f32 %v514, %v522
        %v525 = vpack.c.bf16 %v523, %v523
        %v526 = vpack.c.bf16 %v524, %v524
        %v528 = vsel %vm502, %v525, 0
        %vm530 = vcmask 1043456
        %v532 = vsel %vm530, %v395, 0
        %534 = vmatprep.subr.bf16.mxu0 0
        %535 = vmatpush1.bf16.msra.mxu0 %v532
        %536 = vmatprep.subr.bf16.mxu0 0
        %537 = vmatpush1.bf16.msra.mxu0 0
        %538 = vmatprep.subr.bf16.mxu0 0
        %539 = vmatpush1.bf16.msra.mxu0 0
        %540 = vmatprep.subr.bf16.mxu0 0
        %541 = vmatpush1.bf16.msra.mxu0 0
        %542 = vmatprep.subr.bf16.mxu0 0
        %543 = vmatpush1.bf16.msra.mxu0 0
        %544 = vmatprep.subr.bf16.mxu0 0
        %545 = vmatpush1.bf16.msra.mxu0 0
        %546 = vmatprep.subr.bf16.mxu0 0
        %547 = vmatpush1.bf16.msra.mxu0 0
        %548 = vmatprep.subr.bf16.mxu0 0
        %549 = vmatpush1.bf16.msra.mxu0 0
        %550 = vmatprep.subr.bf16.mxu0 0
        %551 = vmatpush1.bf16.msra.mxu0 0
        %552 = vmatprep.subr.bf16.mxu0 0
        %553 = vmatpush1.bf16.msra.mxu0 0
        %554 = vmatprep.subr.bf16.mxu0 0
        %555 = vmatpush1.bf16.msra.mxu0 0
        %556 = vmatprep.subr.bf16.mxu0 0
        %557 = vmatpush1.bf16.msra.mxu0 0
        %558 = vmatprep.subr.bf16.mxu0 0
        %559 = vmatpush1.bf16.msra.mxu0 0
        %560 = vmatprep.subr.bf16.mxu0 0
        %561 = vmatpush1.bf16.msra.mxu0 0
        %562 = vmatprep.subr.bf16.mxu0 0
        %563 = vmatpush1.bf16.msra.mxu0 0
        %564 = vmatprep.subr.bf16.mxu0 0
        %565 = vmatpush1.bf16.msra.mxu0 0
        %566 = vmatprep.mubr.bf16.mxu0 0
        %567 = vmatmul.mubr.bf16.gmra.mrb[0].mxu0 %v528
        %v568 = vpop.f32.mrb[0].mxu0
        %v569 = vadd.f32 0.0, %v568
        %v570 = vpop.f32.mrb[0].mxu0
        %v571 = vpop.f32.mrb[0].mxu0
        %v572 = vpop.f32.mrb[0].mxu0
        %573 = vdwg.mxu0
        %v575 = vsel %vm502, %v526, 0
        %v578 = vsel %vm530, %v396, 0
        %580 = vmatprep.subr.bf16.mxu0 0
        %581 = vmatpush1.bf16.msra.mxu0 %v578
        %582 = vmatprep.subr.bf16.mxu0 0
        %583 = vmatpush1.bf16.msra.mxu0 0
        %584 = vmatprep.subr.bf16.mxu0 0
        %585 = vmatpush1.bf16.msra.mxu0 0
        %586 = vmatprep.subr.bf16.mxu0 0
        %587 = vmatpush1.bf16.msra.mxu0 0
        %588 = vmatprep.subr.bf16.mxu0 0
        %589 = vmatpush1.bf16.msra.mxu0 0
        %590 = vmatprep.subr.bf16.mxu0 0
        %591 = vmatpush1.bf16.msra.mxu0 0
        %592 = vmatprep.subr.bf16.mxu0 0
        %593 = vmatpush1.bf16.msra.mxu0 0
        %594 = vmatprep.subr.bf16.mxu0 0
        %595 = vmatpush1.bf16.msra.mxu0 0
        %596 = vmatprep.subr.bf16.mxu0 0
        %597 = vmatpush1.bf16.msra.mxu0 0
        %598 = vmatprep.subr.bf16.mxu0 0
        %599 = vmatpush1.bf16.msra.mxu0 0
        %600 = vmatprep.subr.bf16.mxu0 0
        %601 = vmatpush1.bf16.msra.mxu0 0
        %602 = vmatprep.subr.bf16.mxu0 0
        %603 = vmatpush1.bf16.msra.mxu0 0
        %604 = vmatprep.subr.bf16.mxu0 0
        %605 = vmatpush1.bf16.msra.mxu0 0
        %606 = vmatprep.subr.bf16.mxu0 0
        %607 = vmatpush1.bf16.msra.mxu0 0
        %608 = vmatprep.subr.bf16.mxu0 0
        %609 = vmatpush1.bf16.msra.mxu0 0
        %610 = vmatprep.subr.bf16.mxu0 0
        %611 = vmatpush1.bf16.msra.mxu0 0
        %612 = vmatprep.mubr.bf16.mxu0 0
        %613 = vmatmul.mubr.bf16.gmra.mrb[0].mxu0 %v575
        %v614 = vpop.f32.mrb[0].mxu0
        %v615 = vadd.f32 0.0, %v614
        %v616 = vpop.f32.mrb[0].mxu0
        %v617 = vpop.f32.mrb[0].mxu0
        %v618 = vpop.f32.mrb[0].mxu0
        %619 = vdwg.mxu0
        %620 = vst.msk [vmem:[%s366] sm:$0xff] %vm401, %v569
        %621 = vst.msk [vmem:[%s366 + $0x8] sm:$0xff] %vm401, %v615
        %vm622 = vcmask 60416
        %623 = vst.msk [vmem:[%s373] sm:$0xf] %vm622, %v525
        %624 = vst.msk [vmem:[%s373 + $0x4] sm:$0xf] %vm622, %v526
        %s625 = sand.u32 %s159, 1
        %s626 = scalar_lea.sflag [#allocation4], %s625
        %s627 = sand.u32 %s159, 1
        %s628 = smul.addr %s627, 16
        %s629 = scalar_lea.vmem [#allocation8], %s628
        %s630 = sand.u32 %s187, 1
        %s631 = scalar_lea.sflag [#allocation10], %s630
        %s632 = sand.u32 %s187, 1
        %s633 = smul.addr %s632, 8
        %s634 = scalar_lea.vmem [#allocation9], %s633
        // Predicated region
        $region49: #{tpu_custom_call.1} parent=35 // pred_check
          %p635 = pneg %p169
        $region50: #{tpu_custom_call.1} parent=35 // pred_check_branch
          %637 = sbr.rel (%p635) target = $region52
        $region51: #{tpu_custom_call.1} parent=35 // pred_region
          %s638 = smul.u32 2, %s33
          %s640 = ssub.s32 256, 256
          %641 = vsyncadd %s626, %s640
          %s642 = sadd.s32 %s34, %s638
          %s643 = smul.addr %s642, 128
          %s644 = scalar_lea.hbm %s4, %s643
          %s645 = sshll.u32 %s629, 4
          %s646 = int_to_ptr.vmem [resolvable:$true] %s645
          %651 = dma.vmem_to_hbm [thread:$0]  %s646, 256, %s644, %s626, 128, 128, 8
        $region52: #{tpu_custom_call.1} parent=35 // pred_fallthru
          _
        // Predicated region
        $region53: #{tpu_custom_call.1} parent=35 // pred_check
          %p652 = pneg %p197
        $region54: #{tpu_custom_call.1} parent=35 // pred_check_branch
          %654 = sbr.rel (%p652) target = $region56
        $region55: #{tpu_custom_call.1} parent=35 // pred_region
          %s655 = smul.u32 2, %s33
          %s657 = ssub.s32 128, 128
          %658 = vsyncadd %s631, %s657
          %s659 = sadd.s32 %s34, %s655
          %s660 = smul.addr %s659, 64
          %s661 = scalar_lea.hbm %s5, %s660
          %s662 = sshll.u32 %s634, 4
          %s663 = int_to_ptr.vmem [resolvable:$true] %s662
          %668 = dma.vmem_to_hbm [thread:$0]  %s663, 128, %s661, %s631, 64, 64, 4
        $region56: #{tpu_custom_call.1} parent=35 // pred_fallthru
          _
      $region36: #{tpu_custom_call.1} parent=5 // pred_fallthru
        _
      %p669 = scmp.le.s32.totalorder 2, %s24
      // Predicated region
      $region57: #{tpu_custom_call.1} parent=5 // pred_check
        %p670 = pneg %p669
      $region58: #{tpu_custom_call.1} parent=5 // pred_check_branch
        %672 = sbr.rel (%p670) target = $region60
      $region59: #{tpu_custom_call.1} parent=5 // pred_region
        %s673 = ssub.s32 %s24, 2
        // Predicated region
        $region61: #{tpu_custom_call.1} parent=59 // pred_check
          %p674 = pneg %p175
        $region62: #{tpu_custom_call.1} parent=59 // pred_check_branch
          %676 = sbr.rel (%p674) target = $region64
        $region63: #{tpu_custom_call.1} parent=59 // pred_region
          %s677 = sand.u32 %s160, 1
          %s678 = scalar_lea.sflag [#allocation4], %s677
          %s679 = sand.u32 %s160, 1
          %s680 = smul.addr %s679, 16
          %s681 = scalar_lea.vmem [#allocation8], %s680
          %682 = dma.done %s678, 256
        $region64: #{tpu_custom_call.1} parent=59 // pred_fallthru
          _
        // Predicated region
        $region65: #{tpu_custom_call.1} parent=59 // pred_check
          %p683 = pneg %p203
        $region66: #{tpu_custom_call.1} parent=59 // pred_check_branch
          %685 = sbr.rel (%p683) target = $region68
        $region67: #{tpu_custom_call.1} parent=59 // pred_region
          %s686 = sand.u32 %s188, 1
          %s687 = scalar_lea.sflag [#allocation10], %s686
          %s688 = sand.u32 %s188, 1
          %s689 = smul.addr %s688, 8
          %s690 = scalar_lea.vmem [#allocation9], %s689
          %691 = dma.done %s687, 128
        $region68: #{tpu_custom_call.1} parent=59 // pred_fallthru
          _
      $region60: #{tpu_custom_call.1} parent=5 // pred_fallthru
        _
    $region6: #{tpu_custom_call.1} parent=1 // loop_footer
      %s28 = sadd.s32 1, %s24
    $region7: #{tpu_custom_call.1} parent=1 // loop_footer_branch
      %23 = sbr.rel target = $region3
    $region8: #{tpu_custom_call.1} parent=1 // loop_exit
      _
    %692 = vsyncpa [#allocation3], 1
    %s693 = scalar_lea.sflag [#allocation3], 1
    %694 = vsyncpa %s693, 1
    %695 = vsyncpa [#allocation6], 1
    %s696 = scalar_lea.sflag [#allocation6], 1
    %697 = vsyncpa %s696, 1
    %698 = vsyncpa [#allocation4], 1
    %s699 = scalar_lea.sflag [#allocation4], 1
    %700 = vsyncpa %s699, 1
    %701 = vsyncpa [#allocation10], 1
    %s702 = scalar_lea.sflag [#allocation10], 1
    %703 = vsyncpa %s702, 1

</llo_original>
